<compile_context>
chip_gen: v7x
topology: tpu7x:2x2x1
jax: 0.10.0
libtpu: 0.0.40
codegen_flags: <defaults>
</compile_context>

<pallas_src>
import functools

import jax
import jax.numpy as jnp
from jax.experimental import pallas as pl
from jax.experimental.pallas import tpu as pltpu

LANE = 128


def _round_up(x, m):
    return ((x + m - 1) // m) * m


def _pick_tile(dim, pref):
    """dim is a multiple of 128; largest tile <= pref that divides dim."""
    for cand in (1024, 768, 512, 384, 256, 128):
        if cand <= pref and dim % cand == 0:
            return cand
    return LANE


def _pad2d(x, rows, cols):
    r, c = x.shape
    return jnp.pad(x, ((0, rows - r), (0, cols - c)))


def _hw_budget():
    """(vmem_limit_bytes, (tm_pref, tn_pref, tk_pref)) — generation aware."""
    try:
        vmem = int(getattr(pltpu.get_tpu_info(), "vmem_capacity_bytes", 64 << 20))
    except Exception:
        vmem = 64 << 20
    if vmem >= 100 * (1 << 20):          # v5e / v6e: 128 MiB physical VMEM
        return 80 << 20, (512, 512, 1024)
    return 40 << 20, (256, 256, 512)     # v7x: 64 MiB per TensorCore


def _use_panel(kdim, tn, itemsize, vmem_limit):
    # Full-K resident RHS panel is double-buffered; keep it well under budget.
    return 2 * kdim * tn * itemsize <= vmem_limit // 3


# ----------------------------- Pallas kernels ------------------------------ #

def _xw_kernel(*refs, relu_input, has_root, panel, tk):
    """out = relu?(X) @ W  [+ onehot @ root_contrib]  — grid (cols, rows, K)."""
    if has_root:
        x_ref, w_ref, oh_ref, rc_ref, o_ref, acc_ref = refs
    else:
        x_ref, w_ref, o_ref, acc_ref = refs
    k = pl.program_id(2)

    @pl.when(k == 0)
    def _():
        acc_ref[...] = jnp.zeros_like(acc_ref)

    xv = x_ref[...]
    if relu_input:
        xv = jnp.maximum(xv, 0).astype(x_ref.dtype)
    if panel:
        wv = w_ref[pl.ds(pl.multiple_of(k * tk, tk), tk), :]
    else:
        wv = w_ref[...]
    acc_ref[...] += jnp.dot(xv, wv, preferred_element_type=jnp.float32)

    @pl.when(k == pl.num_programs(2) - 1)
    def _():
        out = acc_ref[...]
        if has_root:
            # root-feature enhancement, reconstructed in-kernel (no HBM gather)
            out = out + jnp.dot(oh_ref[...].astype(jnp.float32), rc_ref[...],
                                preferred_element_type=jnp.float32)
        o_ref[...] = out.astype(o_ref.dtype)


def transform(x, w, *, onehot=None, root_contrib=None, relu_input=False,
              out_dtype=jnp.bfloat16, tiles=(256, 256, 512),
              vmem_limit=40 << 20):
    n, kdim = x.shape
    h = w.shape[1]
    tm = _pick_tile(n, tiles[0])
    tn = _pick_tile(h, tiles[1])
    tk = _pick_tile(kdim, tiles[2])
    panel = _use_panel(kdim, tn, w.dtype.itemsize, vmem_limit)
    has_root = onehot is not None

    w_spec = (pl.BlockSpec((kdim, tn), lambda j, i, k: (0, j)) if panel
              else pl.BlockSpec((tk, tn), lambda j, i, k: (k, j)))
    in_specs = [pl.BlockSpec((tm, tk), lambda j, i, k: (i, k)), w_spec]
    args = [x, w]
    if has_root:
        gp = onehot.shape[1]
        in_specs += [pl.BlockSpec((tm, gp), lambda j, i, k: (i, 0)),
                     pl.BlockSpec((gp, tn), lambda j, i, k: (0, j))]
        args += [onehot, root_contrib]

    return pl.pallas_call(
        functools.partial(_xw_kernel, relu_input=relu_input,
                          has_root=has_root, panel=panel, tk=tk),
        out_shape=jax.ShapeDtypeStruct((n, h), out_dtype),
        grid=(h // tn, n // tm, kdim // tk),
        in_specs=in_specs,
        out_specs=pl.BlockSpec((tm, tn), lambda j, i, k: (i, j)),
        scratch_shapes=[pltpu.VMEM((tm, tn), jnp.float32)],
        compiler_params=pltpu.CompilerParams(
            dimension_semantics=("parallel", "parallel", "arbitrary"),
            vmem_limit_bytes=vmem_limit),
    )(*args)


def _prop_kernel(a_ref, z_ref, b_ref, o_ref, acc_ref, *, apply_relu, panel, tk):
    """out = A_hat @ Z + b  [+ relu]  — grid (cols, rows, K=N)."""
    k = pl.program_id(2)

    @pl.when(k == 0)
    def _():
        acc_ref[...] = jnp.zeros_like(acc_ref)

    zv = z_ref[pl.ds(pl.multiple_of(k * tk, tk), tk), :] if panel else z_ref[...]
    acc_ref[...] += jnp.dot(a_ref[...], zv, preferred_element_type=jnp.float32)

    @pl.when(k == pl.num_programs(2) - 1)
    def _():
        out = acc_ref[...] + b_ref[...].astype(jnp.float32)
        if apply_relu:
            out = jnp.maximum(out, 0.0)
        o_ref[...] = out.astype(o_ref.dtype)


def propagate(a, z, b, *, apply_relu=False, out_dtype=jnp.bfloat16,
              tiles=(256, 256, 512), vmem_limit=40 << 20):
    n = a.shape[0]
    h = z.shape[1]
    tm = _pick_tile(n, tiles[0])
    tn = _pick_tile(h, tiles[1])
    tk = _pick_tile(n, tiles[2])
    panel = _use_panel(n, tn, z.dtype.itemsize, vmem_limit)
    z_spec = (pl.BlockSpec((n, tn), lambda j, i, k: (0, j)) if panel
              else pl.BlockSpec((tk, tn), lambda j, i, k: (k, j)))
    return pl.pallas_call(
        functools.partial(_prop_kernel, apply_relu=apply_relu, panel=panel, tk=tk),
        out_shape=jax.ShapeDtypeStruct((n, h), out_dtype),
        grid=(h // tn, n // tm, n // tk),
        in_specs=[pl.BlockSpec((tm, tk), lambda j, i, k: (i, k)),
                  z_spec,
                  pl.BlockSpec((1, tn), lambda j, i, k: (0, j))],
        out_specs=pl.BlockSpec((tm, tn), lambda j, i, k: (i, j)),
        scratch_shapes=[pltpu.VMEM((tm, tn), jnp.float32)],
        compiler_params=pltpu.CompilerParams(
            dimension_semantics=("parallel", "parallel", "arbitrary"),
            vmem_limit_bytes=vmem_limit),
    )(a, z, b.reshape(1, h))


def _prop_pool_kernel(a_ref, z_ref, b_ref, m_ref, o_ref, acc_ref, *, panel, tk):
    """pooled[c] = M_norm[rows of core c] @ relu(A_hat @ Z + b), fused epilogue.

    grid = (core, cols, row-tiles-per-core, K); the pooled output block depends
    only on (core, col) so it stays VMEM-resident and accumulates across i, k.
    Per-core partial slabs are summed in glue (no cross-core races).
    """
    i = pl.program_id(2)
    k = pl.program_id(3)

    @pl.when(k == 0)
    def _():
        acc_ref[...] = jnp.zeros_like(acc_ref)

    @pl.when(jnp.logical_and(i == 0, k == 0))
    def _():
        o_ref[...] = jnp.zeros_like(o_ref)

    zv = z_ref[pl.ds(pl.multiple_of(k * tk, tk), tk), :] if panel else z_ref[...]
    acc_ref[...] += jnp.dot(a_ref[...], zv, preferred_element_type=jnp.float32)

    @pl.when(k == pl.num_programs(3) - 1)
    def _():
        h2 = jnp.maximum(acc_ref[...] + b_ref[...].astype(jnp.float32), 0.0)
        o_ref[...] += jnp.dot(m_ref[...], h2.astype(m_ref.dtype),
                              preferred_element_type=jnp.float32)


def propagate_relu_mean_pool(a, z, b, m_norm, *, tiles=(256, 256, 512),
                             vmem_limit=40 << 20):
    n = a.shape[0]
    h = z.shape[1]
    gpad = m_norm.shape[0]
    tm = _pick_tile(n, tiles[0])
    tn = _pick_tile(h, tiles[1])
    tk = _pick_tile(n, tiles[2])
    rows = n // tm
    ncores = 2 if (rows % 2 == 0 and rows >= 2) else 1   # v7x megacore split
    rpc = rows // ncores
    panel = _use_panel(n, tn, z.dtype.itemsize, vmem_limit)
    z_spec = (pl.BlockSpec((n, tn), lambda c, j, i, k: (0, j)) if panel
              else pl.BlockSpec((tk, tn), lambda c, j, i, k: (k, j)))
    partial = pl.pallas_call(
        functools.partial(_prop_pool_kernel, panel=panel, tk=tk),
        out_shape=jax.ShapeDtypeStruct((ncores, gpad, h), jnp.float32),
        grid=(ncores, h // tn, rpc, n // tk),
        in_specs=[pl.BlockSpec((tm, tk), lambda c, j, i, k: (c * rpc + i, k)),
                  z_spec,
                  pl.BlockSpec((1, tn), lambda c, j, i, k: (0, j)),
                  pl.BlockSpec((gpad, tm), lambda c, j, i, k: (0, c * rpc + i))],
        out_specs=pl.BlockSpec((None, gpad, tn), lambda c, j, i, k: (c, 0, j)),
        scratch_shapes=[pltpu.VMEM((tm, tn), jnp.float32)],
        compiler_params=pltpu.CompilerParams(
            dimension_semantics=("parallel", "parallel", "arbitrary", "arbitrary"),
            vmem_limit_bytes=vmem_limit),
    )(a, z, b.reshape(1, h), m_norm)
    return partial.sum(axis=0)


# --------------------------------- Glue ------------------------------------ #

def build_norm_adj(edge_index, num_nodes, add_self_loops=True):
    """Dense GCN normalization D^{-1/2} (A [+ I]) D^{-1/2}.

    edge_index (2,E): row0=source, row1=target (PyG flow='source_to_target');
    degree is the row sum of A[dst,src], i.e. computed on the target index.
    """
    src, dst = edge_index[0], edge_index[1]
    a = jnp.zeros((num_nodes, num_nodes), jnp.float32).at[dst, src].add(1.0)
    if add_self_loops:
        a = a + jnp.eye(num_nodes, dtype=jnp.float32)
    deg = a.sum(axis=1)
    dinv = jnp.where(deg > 0, jax.lax.rsqrt(deg), 0.0)
    return a * dinv[:, None] * dinv[None, :]


def bigcn_rumour_gcn_forward(x, edge_index, BU_edge_index, rootindex, batch_vec,
                             params, is_BU=False, skip_layer_2=False,
                             layer_1_no_self_loops=False,
                             layer_2_no_self_loops=False):
    """TD/BU rumour GCN forward (BiGCN). Returns (num_graphs, out+hid), f32."""
    ei = BU_edge_index if is_BU else edge_index
    n, in_feats = x.shape
    num_graphs = params['num_graphs']
    w1, b1, w2, b2 = params['w1'], params['b1'], params['w2'], params['b2']
    hid, out_feats = w1.shape[1], w2.shape[1]

    vmem_limit, tiles = _hw_budget()

    # padded / tile-aligned sizes (lane-dense outputs)
    n_pad = _round_up(n, LANE)
    in_pad = _round_up(in_feats, LANE)
    hid_pad = _round_up(hid, LANE)
    out_pad = _round_up(out_feats, LANE)
    g_pad = _round_up(max(num_graphs, 1), LANE)   # graph axis, MXU-friendly

    # normalized adjacencies (reuse when the self-loop flags match)
    a1 = build_norm_adj(ei, n, add_self_loops=not layer_1_no_self_loops)
    a2 = a1 if layer_2_no_self_loops == layer_1_no_self_loops else \
        build_norm_adj(ei, n, add_self_loops=not layer_2_no_self_loops)
    a1p = _pad2d(a1, n_pad, n_pad).astype(jnp.bfloat16)
    a2p = a1p if a2 is a1 else _pad2d(a2, n_pad, n_pad).astype(jnp.bfloat16)

    xp = _pad2d(x, n_pad, in_pad).astype(jnp.bfloat16)
    w1p = _pad2d(w1, in_pad, hid_pad).astype(jnp.bfloat16)
    b1p = jnp.pad(b1, (0, hid_pad - hid)).astype(jnp.float32)
    w2_top = _pad2d(w2[:hid], hid_pad, out_pad).astype(jnp.bfloat16)
    w2_bot = w2[hid:]                                      # (in, out), f32 glue
    b2p = jnp.pad(b2, (0, out_pad - out_feats)).astype(jnp.float32)

    # --- conv1:  H1 = A1 @ (X @ W1) + b1   (this is x2 of the reference) ----
    xw1 = transform(xp, w1p, tiles=tiles, vmem_limit=vmem_limit)
    # NOTE: padded rows of h1 equal b1 (A's padded rows are zero, bias added
    # unconditionally); they are masked downstream by the zero columns of A2
    # and m_norm, so the final result is unaffected.  Do not consume h1[n:].
    h1 = propagate(a1p, xw1, b1p, apply_relu=False,
                   tiles=tiles, vmem_limit=vmem_limit)      # (n_pad, hid_pad) bf16

    # per-graph one-hot (also the mean-pool assignment), bf16 for the kernels
    onehot_gn = (batch_vec[None, :] ==
                 jnp.arange(num_graphs)[:, None]).astype(jnp.float32)   # (B, n)
    counts = jnp.maximum(onehot_gn.sum(axis=1, keepdims=True), 1.0)
    m_f32 = onehot_gn / counts                                          # (B, n)
    m_norm = _pad2d(m_f32, g_pad, n_pad).astype(jnp.bfloat16)           # pool
    onehot_ng = _pad2d(onehot_gn.T, n_pad, g_pad).astype(jnp.bfloat16)  # root add

    # root-enhancement, concat-free (tiny B x IN x OUT matmul, f32):
    #   relu(cat(h1, re1)) @ W2 = relu(h1) @ W2_top + (relu(x[root]) @ W2_bot)[batch]
    root_contrib = jnp.maximum(x[rootindex], 0.0) @ w2_bot              # (B, out)
    root_contrib = _pad2d(root_contrib, g_pad, out_pad).astype(jnp.float32)
    # F.dropout(..., training=self.training): identity in eval mode (LRP pass)

    if skip_layer_2:
        # TODO(synk): LRP autograd_fn's exact skip_layer_2 semantics may differ;
        # rarely-used flag kept in plain jnp for correctness, not speed.
        h1_f = h1[:n, :hid].astype(jnp.float32)
        re1 = x[rootindex][batch_vec]
        feats = jnp.concatenate(
            [jnp.maximum(jnp.concatenate([h1_f, re1], axis=1), 0.0),
             h1_f[rootindex][batch_vec]], axis=1)
        return m_f32 @ feats

    # --- conv2 transform:  Z = relu(H1) @ W2_top + onehot @ root_contrib ----
    z2 = transform(h1, w2_top, onehot=onehot_ng, root_contrib=root_contrib,
                   relu_input=True, tiles=tiles, vmem_limit=vmem_limit)

    # --- conv2 propagate + ReLU + fused scatter_mean pooling ----------------
    pooled = propagate_relu_mean_pool(a2p, z2, b2p, m_norm,
                                      tiles=tiles, vmem_limit=vmem_limit)
    pooled = pooled[:num_graphs, :out_feats]

    # scatter_mean(re2, batch) == x2[rootindex]  (rows of re2 repeat per graph)
    root_h1 = h1[rootindex][:, :hid].astype(jnp.float32)                # (B, hid)

    return jnp.concatenate([pooled, root_h1], axis=1)                   # (B, out+hid)


# f32 reference (literal original flow) for tolerance validation of bf16 path
def reference_forward(x, edge_index, rootindex, batch_vec, params):
    n = x.shape[0]
    B = params['num_graphs']
    a1 = build_norm_adj(edge_index, n, add_self_loops=True)
    h = a1 @ (x @ params['w1']) + params['b1']
    x2 = h
    re1 = x[rootindex][batch_vec]
    h = jnp.maximum(jnp.concatenate([h, re1], axis=1), 0.0)
    h = jnp.maximum(a1 @ (h @ params['w2']) + params['b2'], 0.0)
    re2 = x2[rootindex][batch_vec]
    h = jnp.concatenate([h, re2], axis=1)
    m = (batch_vec[None, :] == jnp.arange(B)[:, None]).astype(jnp.float32)
    m = m / m.sum(axis=1, keepdims=True)
    return m @ h


# --------------------------------- Main ------------------------------------ #

if __name__ == "__main__":
    key = jax.random.PRNGKey(0)

    B = 2                # graphs in the batch
    NODES_PER = 64
    N = B * NODES_PER    # 128 total nodes
    IN_FEATS = 128
    HID = 64
    OUT = 64

    k1, k2, k3, k4, k5 = jax.random.split(key, 5)
    x = jax.random.normal(k1, (N, IN_FEATS), jnp.float32)

    # heap-shaped 64-node propagation tree per graph (parent -> child = TD)
    children = jnp.arange(1, NODES_PER, dtype=jnp.int32)
    parents = (children - 1) // 2
    tree = jnp.stack([parents, children])                       # (2, 63)
    edge_index = jnp.concatenate([tree, tree + NODES_PER], axis=1)
    BU_edge_index = jnp.flip(edge_index, axis=0)                 # BU = reversed
    rootindex = jnp.array([0, NODES_PER], dtype=jnp.int32)
    batch_vec = jnp.repeat(jnp.arange(B, dtype=jnp.int32), NODES_PER)
    root = x[rootindex]  # data.root — unused by the rumour GCN forward itself

    def glorot(k, shape):
        limit = jnp.sqrt(6.0 / (shape[0] + shape[1]))
        return jax.random.uniform(k, shape, jnp.float32, -limit, limit)

    params = {
        'w1': glorot(k2, (IN_FEATS, HID)),                 # GCNConv(in, hid)
        'b1': 0.01 * jax.random.normal(k4, (HID,), jnp.float32),
        'w2': glorot(k3, (HID + IN_FEATS, OUT)),           # GCNConv(hid+in, out)
        'b2': 0.01 * jax.random.normal(k5, (OUT,), jnp.float32),
        'num_graphs': B,
    }

    out = bigcn_rumour_gcn_forward(x, edge_index, BU_edge_index, rootindex,
                                   batch_vec, params, is_BU=False)
    out = jax.block_until_ready(out)
    assert out.shape == (B, OUT + HID) and out.dtype == jnp.float32

    ref = reference_forward(x, edge_index, rootindex, batch_vec, params)
    assert bool(jnp.allclose(out, ref, rtol=5e-2, atol=5e-2)), (
        "bf16 Pallas path diverged from f32 reference: "
        f"max_abs_err={float(jnp.max(jnp.abs(out - ref)))}")

    print("KERNEL_OK")
</pallas_src>

<mosaic_0001>
module attributes {stable_mosaic.version = 11 : i64} {
  func.func @_xw_kernel(%arg0: i32, %arg1: i32, %arg2: i32, %arg3: memref<128x128xbf16, #tpu.memory_space<vmem>>, %arg4: memref<128x128xbf16, #tpu.memory_space<vmem>>, %arg5: memref<128x128xbf16, #tpu.memory_space<vmem>>, %arg6: memref<128x128xf32, #tpu.memory_space<vmem>>) attributes {dimension_semantics = [#tpu.dimension_semantics<parallel>, #tpu.dimension_semantics<parallel>, #tpu.dimension_semantics<arbitrary>], iteration_bounds = array<i64: 1, 1, 1>, scalar_prefetch = 0 : i64, scratch_operands = 1 : i64, tpu.core_type = #tpu.core_type<tc>, window_params = [{transform_indices = @transform_0, window_bounds = array<i64: 128, 128>}, {transform_indices = @transform_1, window_bounds = array<i64: 128, 128>}, {transform_indices = @transform_2, window_bounds = array<i64: 128, 128>}]} {
    %c0_i32 = arith.constant 0 : i32
    %0 = arith.cmpi eq, %arg2, %c0_i32 : i32
    %1 = arith.extui %0 : i1 to i32
    %c0_i32_0 = arith.constant 0 : i32
    %2 = arith.cmpi ne, %1, %c0_i32_0 : i32
    scf.if %2 {
      %cst_9 = arith.constant 0.000000e+00 : f32
      %15 = vector.broadcast %cst_9 : f32 to vector<128x128xf32>
      %c0_10 = arith.constant 0 : index
      %c0_11 = arith.constant 0 : index
      %16 = vector.load %arg6[%c0_10, %c0_11] : memref<128x128xf32, #tpu.memory_space<vmem>>, vector<128x128xf32>
      tpu.vector_store %arg6[%c0_10, %c0_11], %15 {strides = array<i32>} : memref<128x128xf32, #tpu.memory_space<vmem>>, vector<128x128xf32>,
    } else {
    }
    %c0 = arith.constant 0 : index
    %c0_1 = arith.constant 0 : index
    %3 = vector.load %arg3[%c0, %c0_1] : memref<128x128xbf16, #tpu.memory_space<vmem>>, vector<128x128xbf16>
    %c128_i32 = arith.constant 128 : i32
    %4 = arith.muli %arg2, %c128_i32 : i32
    %5 = tpu.assume_multiple %4, 128 : i32
    %6 = arith.index_cast %5 : i32 to index
    %c0_2 = arith.constant 0 : index
    %7 = vector.load %arg4[%6, %c0_2] : memref<128x128xbf16, #tpu.memory_space<vmem>>, vector<128x128xbf16>
    %c0_3 = arith.constant 0 : index
    %c0_4 = arith.constant 0 : index
    %8 = vector.load %arg6[%c0_3, %c0_4] : memref<128x128xf32, #tpu.memory_space<vmem>>, vector<128x128xf32>
    %cst = arith.constant dense<0.000000e+00> : vector<128x128xf32>
    %9 = tpu.matmul %3, %7, %cst {dimension_numbers = #tpu.dot_dimension_numbers<[1], [0], [0], [1], [0, 0, 1, 1], [], []>} : vector<128x128xbf16>, vector<128x128xbf16>, vector<128x128xf32> -> vector<128x128xf32>
    %10 = arith.addf %8, %9 : vector<128x128xf32>
    %c0_5 = arith.constant 0 : index
    %c0_6 = arith.constant 0 : index
    %11 = vector.load %arg6[%c0_5, %c0_6] : memref<128x128xf32, #tpu.memory_space<vmem>>, vector<128x128xf32>
    tpu.vector_store %arg6[%c0_5, %c0_6], %10 {strides = array<i32>} : memref<128x128xf32, #tpu.memory_space<vmem>>, vector<128x128xf32>,
    %c0_i32_7 = arith.constant 0 : i32
    %12 = arith.cmpi eq, %arg2, %c0_i32_7 : i32
    %13 = arith.extui %12 : i1 to i32
    %c0_i32_8 = arith.constant 0 : i32
    %14 = arith.cmpi ne, %13, %c0_i32_8 : i32
    scf.if %14 {
      %c0_9 = arith.constant 0 : index
      %c0_10 = arith.constant 0 : index
      %15 = vector.load %arg6[%c0_9, %c0_10] : memref<128x128xf32, #tpu.memory_space<vmem>>, vector<128x128xf32>
      %16 = arith.truncf %15 : vector<128x128xf32> to vector<128x128xbf16>
      %c0_11 = arith.constant 0 : index
      %c0_12 = arith.constant 0 : index
      %17 = vector.load %arg5[%c0_11, %c0_12] : memref<128x128xbf16, #tpu.memory_space<vmem>>, vector<128x128xbf16>
      tpu.vector_store %arg5[%c0_11, %c0_12], %16 {strides = array<i32>} : memref<128x128xbf16, #tpu.memory_space<vmem>>, vector<128x128xbf16>,
    } else {
    }
    return
  }
  func.func @transform_0(%arg0: i32, %arg1: i32, %arg2: i32) -> (i32, i32) {
    %c0_i32 = arith.constant 0 : i32
    return %arg1, %arg2 : i32, i32
  }
  func.func @transform_1(%arg0: i32, %arg1: i32, %arg2: i32) -> (i32, i32) {
    %c0_i32 = arith.constant 0 : i32
    %c0_i32_0 = arith.constant 0 : i32
    return %c0_i32, %arg0 : i32, i32
  }
  func.func @transform_2(%arg0: i32, %arg1: i32, %arg2: i32) -> (i32, i32) {
    %c0_i32 = arith.constant 0 : i32
    return %arg1, %arg0 : i32, i32
  }
}

</mosaic_0001>

<llo_original>
// kernel: tpu_custom_call.1
$region0: #{tpu_custom_call.1}
  #allocation0 [shape = 'u32[]', space=smem, size = 0x4, offset = 0x4, fixed_abs, tag = 'smem constant byte address 0x4 - core index']
  #allocation1 [shape = 'u32[144,128]{1,0:T(1,128)}', space=vmem, size = 0x12000, scoped, tag = 'internal scratch']
  #allocation2 [shape = 'f32[128,128]{1,0:T(8,128)}', space=vmem, size = 0x10000, scoped, tag = 'scratch operand']
  %s0 = inlined_call_operand.hbm [shape: bf16[128,128], index: 0, kind: input, shape index: {}]
  %s1 = inlined_call_operand.hbm [shape: bf16[128,128], index: 1, kind: input, shape index: {}]
  %s2 = inlined_call_operand.hbm [shape: bf16[128,128], index: 2, kind: output, shape index: {}]
  %s3 = sld [smem:[#allocation0]]
  $region34: #{tpu_custom_call.1} parent=0
    _
  %s5 = ssub.s32 1, %s3
  %s6 = scalar_select 0, %s5, %s3
  $region1: #{tpu_custom_call.1} parent=0
    #allocation3 [shape = 'u8[32768]{0}', space=vmem, size = 0x8000, scoped, tag = 'input window, operand 0, single buffered']
    #allocation4 [shape = 's32[1]{0}', space=sflag, size = 0x4, scoped, tag = 'scoped memory for tpu_custom_call.1']
    #allocation5 [shape = 's32[1]{0}', space=sflag, size = 0x4, scoped, tag = 'scoped memory for tpu_custom_call.1']
    #allocation6 [shape = 'u8[32768]{0}', space=vmem, size = 0x8000, scoped, tag = 'input window, operand 1, single buffered']
    #allocation7 [shape = 's32[1]{0}', space=sflag, size = 0x4, scoped, tag = 'scoped memory for tpu_custom_call.1']
    #allocation8 [shape = 'u8[32768]{0}', space=vmem, size = 0x8000, scoped, tag = 'output window, operand 0, single buffered']
    %7 = vsyncpa [#allocation4], 0
    %8 = vsyncpa [#allocation7], 0
    %9 = vsyncpa [#allocation5], 0
    // Predicated region
    $region2: #{tpu_custom_call.1} parent=1 // pred_check
      _
    $region3: #{tpu_custom_call.1} parent=1 // pred_check_branch
      %11 = sbr.rel (0) target = $region5
    $region4: #{tpu_custom_call.1} parent=1 // pred_region
      %s13 = ssub.s32 1024, 1024
      %14 = vsyncadd [#allocation4], %s13
      %s15 = sshll.u32 [#allocation3], 4
      %s16 = int_to_ptr.vmem [resolvable:$true] %s15
      %21 = dma.hbm_to_vmem [thread:$0]  %s0, 1024, %s16, [#allocation4], 64, 64, 4
    $region5: #{tpu_custom_call.1} parent=1 // pred_fallthru
      _
    // Predicated region
    $region6: #{tpu_custom_call.1} parent=1 // pred_check
      _
    $region7: #{tpu_custom_call.1} parent=1 // pred_check_branch
      %23 = sbr.rel (0) target = $region9
    $region8: #{tpu_custom_call.1} parent=1 // pred_region
      %s25 = ssub.s32 1024, 1024
      %26 = vsyncadd [#allocation7], %s25
      %s27 = sshll.u32 [#allocation6], 4
      %s28 = int_to_ptr.vmem [resolvable:$true] %s27
      %33 = dma.hbm_to_vmem [thread:$0]  %s1, 1024, %s28, [#allocation7], 64, 64, 4
    $region9: #{tpu_custom_call.1} parent=1 // pred_fallthru
      _
    // Predicated region
    $region10: #{tpu_custom_call.1} parent=1 // pred_check
      _
    $region11: #{tpu_custom_call.1} parent=1 // pred_check_branch
      %35 = sbr.rel (0) target = $region13
    $region12: #{tpu_custom_call.1} parent=1 // pred_region
      %36 = dma.done [#allocation4], 1024
    $region13: #{tpu_custom_call.1} parent=1 // pred_fallthru
      _
    // Predicated region
    $region14: #{tpu_custom_call.1} parent=1 // pred_check
      _
    $region15: #{tpu_custom_call.1} parent=1 // pred_check_branch
      %38 = sbr.rel (0) target = $region17
    $region16: #{tpu_custom_call.1} parent=1 // pred_region
      %39 = dma.done [#allocation7], 1024
    $region17: #{tpu_custom_call.1} parent=1 // pred_fallthru
      _
    %p41 = scmp.eq.s32.totalorder 0, 0
    // Predicated region
    $region18: #{tpu_custom_call.1} parent=1 // pred_check
      %p42 = pneg %p41
    $region19: #{tpu_custom_call.1} parent=1 // pred_check_branch
      %44 = sbr.rel (%p42) target = $region21
    $region20: #{tpu_custom_call.1} parent=1 // pred_region
      %45 = vst [vmem:[#allocation2] sm:$0xff] 0.0
      %46 = vst [vmem:[#allocation2 + $0x8] sm:$0xff] 0.0
      %47 = vst [vmem:[#allocation2 + $0x10] sm:$0xff] 0.0
      %48 = vst [vmem:[#allocation2 + $0x18] sm:$0xff] 0.0
      %49 = vst [vmem:[#allocation2 + $0x20] sm:$0xff] 0.0
      %50 = vst [vmem:[#allocation2 + $0x28] sm:$0xff] 0.0
      %51 = vst [vmem:[#allocation2 + $0x30] sm:$0xff] 0.0
      %52 = vst [vmem:[#allocation2 + $0x38] sm:$0xff] 0.0
      %53 = vst [vmem:[#allocation2 + $0x40] sm:$0xff] 0.0
      %54 = vst [vmem:[#allocation2 + $0x48] sm:$0xff] 0.0
      %55 = vst [vmem:[#allocation2 + $0x50] sm:$0xff] 0.0
      %56 = vst [vmem:[#allocation2 + $0x58] sm:$0xff] 0.0
      %57 = vst [vmem:[#allocation2 + $0x60] sm:$0xff] 0.0
      %58 = vst [vmem:[#allocation2 + $0x68] sm:$0xff] 0.0
      %59 = vst [vmem:[#allocation2 + $0x70] sm:$0xff] 0.0
      %60 = vst [vmem:[#allocation2 + $0x78] sm:$0xff] 0.0
    $region21: #{tpu_custom_call.1} parent=1 // pred_fallthru
      _
    %v61 = vld [vmem:[#allocation3] sm:$0xf]
    %v62 = vld [vmem:[#allocation3 + $0x4] sm:$0xf]
    %v63 = vld [vmem:[#allocation3 + $0x8] sm:$0xf]
    %v64 = vld [vmem:[#allocation3 + $0xc] sm:$0xf]
    %v65 = vld [vmem:[#allocation3 + $0x10] sm:$0xf]
    %v66 = vld [vmem:[#allocation3 + $0x14] sm:$0xf]
    %v67 = vld [vmem:[#allocation3 + $0x18] sm:$0xf]
    %v68 = vld [vmem:[#allocation3 + $0x1c] sm:$0xf]
    %v69 = vld [vmem:[#allocation3 + $0x20] sm:$0xf]
    %v70 = vld [vmem:[#allocation3 + $0x24] sm:$0xf]
    %v71 = vld [vmem:[#allocation3 + $0x28] sm:$0xf]
    %v72 = vld [vmem:[#allocation3 + $0x2c] sm:$0xf]
    %v73 = vld [vmem:[#allocation3 + $0x30] sm:$0xf]
    %v74 = vld [vmem:[#allocation3 + $0x34] sm:$0xf]
    %v75 = vld [vmem:[#allocation3 + $0x38] sm:$0xf]
    %v76 = vld [vmem:[#allocation3 + $0x3c] sm:$0xf]
    %s77 = smul.u32 0, 128
    %s78 = sshra.s32 %s77, 3
    %s79 = sand.u32 %s77, 7
    %s80 = smul.addr %s78, 4
    %s81 = scalar_lea.vmem [#allocation6], %s80
    %v82 = vld [vmem:[%s81] sm:$0xf]
    %v83 = vld [vmem:[%s81 + $0x4] sm:$0xf]
    %v84 = vld [vmem:[%s81 + $0x8] sm:$0xf]
    %v85 = vld [vmem:[%s81 + $0xc] sm:$0xf]
    %v86 = vld [vmem:[%s81 + $0x10] sm:$0xf]
    %v87 = vld [vmem:[%s81 + $0x14] sm:$0xf]
    %v88 = vld [vmem:[%s81 + $0x18] sm:$0xf]
    %v89 = vld [vmem:[%s81 + $0x1c] sm:$0xf]
    %v90 = vld [vmem:[%s81 + $0x20] sm:$0xf]
    %v91 = vld [vmem:[%s81 + $0x24] sm:$0xf]
    %v92 = vld [vmem:[%s81 + $0x28] sm:$0xf]
    %v93 = vld [vmem:[%s81 + $0x2c] sm:$0xf]
    %v94 = vld [vmem:[%s81 + $0x30] sm:$0xf]
    %v95 = vld [vmem:[%s81 + $0x34] sm:$0xf]
    %v96 = vld [vmem:[%s81 + $0x38] sm:$0xf]
    %v97 = vld [vmem:[%s81 + $0x3c] sm:$0xf]
    %v98 = vld [vmem:[#allocation2] sm:$0xff]
    %v99 = vld [vmem:[#allocation2 + $0x8] sm:$0xff]
    %v100 = vld [vmem:[#allocation2 + $0x10] sm:$0xff]
    %v101 = vld [vmem:[#allocation2 + $0x18] sm:$0xff]
    %v102 = vld [vmem:[#allocation2 + $0x20] sm:$0xff]
    %v103 = vld [vmem:[#allocation2 + $0x28] sm:$0xff]
    %v104 = vld [vmem:[#allocation2 + $0x30] sm:$0xff]
    %v105 = vld [vmem:[#allocation2 + $0x38] sm:$0xff]
    %v106 = vld [vmem:[#allocation2 + $0x40] sm:$0xff]
    %v107 = vld [vmem:[#allocation2 + $0x48] sm:$0xff]
    %v108 = vld [vmem:[#allocation2 + $0x50] sm:$0xff]
    %v109 = vld [vmem:[#allocation2 + $0x58] sm:$0xff]
    %v110 = vld [vmem:[#allocation2 + $0x60] sm:$0xff]
    %v111 = vld [vmem:[#allocation2 + $0x68] sm:$0xff]
    %v112 = vld [vmem:[#allocation2 + $0x70] sm:$0xff]
    %v113 = vld [vmem:[#allocation2 + $0x78] sm:$0xff]
    %v130 = vunpack.c.l.b16 %v61
    %v131 = vunpack.c.l.b16 %v62
    %v132 = vunpack.c.l.b16 %v63
    %v133 = vunpack.c.l.b16 %v64
    %v134 = vunpack.c.l.b16 %v65
    %v135 = vunpack.c.l.b16 %v66
    %v136 = vunpack.c.l.b16 %v67
    %v137 = vunpack.c.l.b16 %v68
    %v138 = vunpack.c.l.b16 %v69
    %v139 = vunpack.c.l.b16 %v70
    %v140 = vunpack.c.l.b16 %v71
    %v141 = vunpack.c.l.b16 %v72
    %v142 = vunpack.c.l.b16 %v73
    %v143 = vunpack.c.l.b16 %v74
    %v144 = vunpack.c.l.b16 %v75
    %v145 = vunpack.c.l.b16 %v76
    %v146 = vpack.c.b16 %v131, %v130
    %v147 = vpack.c.b16 %v133, %v132
    %v148 = vpack.c.b16 %v135, %v134
    %v149 = vpack.c.b16 %v137, %v136
    %v150 = vpack.c.b16 %v139, %v138
    %v151 = vpack.c.b16 %v141, %v140
    %v152 = vpack.c.b16 %v143, %v142
    %v153 = vpack.c.b16 %v145, %v144
    %v178 = vunpack.c.l.b16 %v82
    %v179 = vunpack.c.l.b16 %v83
    %v180 = vunpack.c.l.b16 %v84
    %v181 = vunpack.c.l.b16 %v85
    %v182 = vunpack.c.l.b16 %v86
    %v183 = vunpack.c.l.b16 %v87
    %v184 = vunpack.c.l.b16 %v88
    %v185 = vunpack.c.l.b16 %v89
    %v186 = vunpack.c.l.b16 %v90
    %v187 = vunpack.c.l.b16 %v91
    %v188 = vunpack.c.l.b16 %v92
    %v189 = vunpack.c.l.b16 %v93
    %v190 = vunpack.c.l.b16 %v94
    %v191 = vunpack.c.l.b16 %v95
    %v192 = vunpack.c.l.b16 %v96
    %v193 = vunpack.c.l.b16 %v97
    %v194 = vpack.c.b16 %v179, %v178
    %v195 = vpack.c.b16 %v181, %v180
    %v196 = vpack.c.b16 %v183, %v182
    %v197 = vpack.c.b16 %v185, %v184
    %v198 = vpack.c.b16 %v187, %v186
    %v199 = vpack.c.b16 %v189, %v188
    %v200 = vpack.c.b16 %v191, %v190
    %v201 = vpack.c.b16 %v193, %v192
    %210 = vmatprep.subr.bf16.mxu0 0
    %211 = vmatpush1.bf16.msra.mxu0 %v194
    %212 = vmatprep.subr.bf16.mxu0 0
    %213 = vmatpush1.bf16.msra.mxu0 %v195
    %214 = vmatprep.subr.bf16.mxu0 0
    %215 = vmatpush1.bf16.msra.mxu0 %v196
    %216 = vmatprep.subr.bf16.mxu0 0
    %217 = vmatpush1.bf16.msra.mxu0 %v197
    %218 = vmatprep.subr.bf16.mxu0 0
    %219 = vmatpush1.bf16.msra.mxu0 %v198
    %220 = vmatprep.subr.bf16.mxu0 0
    %221 = vmatpush1.bf16.msra.mxu0 %v199
    %222 = vmatprep.subr.bf16.mxu0 0
    %223 = vmatpush1.bf16.msra.mxu0 %v200
    %224 = vmatprep.subr.bf16.mxu0 0
    %225 = vmatpush1.bf16.msra.mxu0 %v201
    %226 = vmatprep.subr.bf16.mxu0 0
    %227 = vmatpush1.bf16.msra.mxu0 0
    %228 = vmatprep.subr.bf16.mxu0 0
    %229 = vmatpush1.bf16.msra.mxu0 0
    %230 = vmatprep.subr.bf16.mxu0 0
    %231 = vmatpush1.bf16.msra.mxu0 0
    %232 = vmatprep.subr.bf16.mxu0 0
    %233 = vmatpush1.bf16.msra.mxu0 0
    %234 = vmatprep.subr.bf16.mxu0 0
    %235 = vmatpush1.bf16.msra.mxu0 0
    %236 = vmatprep.subr.bf16.mxu0 0
    %237 = vmatpush1.bf16.msra.mxu0 0
    %238 = vmatprep.subr.bf16.mxu0 0
    %239 = vmatpush1.bf16.msra.mxu0 0
    %240 = vmatprep.subr.bf16.mxu0 0
    %241 = vmatpush1.bf16.msra.mxu0 0
    %242 = vmatprep.mubr.bf16.mxu0 0
    %243 = vmatmul.mubr.bf16.gmra.mrb[0].mxu0 %v146
    %v244 = vpop.f32.mrb[0].mxu0
    %v245 = vadd.f32 0.0, %v244
    %v246 = vpop.f32.mrb[0].mxu0
    %v247 = vpop.f32.mrb[0].mxu0
    %v248 = vadd.f32 0.0, %v247
    %v249 = vpop.f32.mrb[0].mxu0
    %250 = vmatprep.mubr.bf16.mxu0 0
    %251 = vmatmul.mubr.bf16.gmra.mrb[0].mxu0 %v147
    %v252 = vpop.f32.mrb[0].mxu0
    %v253 = vadd.f32 0.0, %v252
    %v254 = vpop.f32.mrb[0].mxu0
    %v255 = vpop.f32.mrb[0].mxu0
    %v256 = vadd.f32 0.0, %v255
    %v257 = vpop.f32.mrb[0].mxu0
    %258 = vmatprep.mubr.bf16.mxu0 0
    %259 = vmatmul.mubr.bf16.gmra.mrb[0].mxu0 %v148
    %v260 = vpop.f32.mrb[0].mxu0
    %v261 = vadd.f32 0.0, %v260
    %v262 = vpop.f32.mrb[0].mxu0
    %v263 = vpop.f32.mrb[0].mxu0
    %v264 = vadd.f32 0.0, %v263
    %v265 = vpop.f32.mrb[0].mxu0
    %266 = vmatprep.mubr.bf16.mxu0 0
    %267 = vmatmul.mubr.bf16.gmra.mrb[0].mxu0 %v149
    %v268 = vpop.f32.mrb[0].mxu0
    %v269 = vadd.f32 0.0, %v268
    %v270 = vpop.f32.mrb[0].mxu0
    %v271 = vpop.f32.mrb[0].mxu0
    %v272 = vadd.f32 0.0, %v271
    %v273 = vpop.f32.mrb[0].mxu0
    %274 = vmatprep.mubr.bf16.mxu0 0
    %275 = vmatmul.mubr.bf16.gmra.mrb[0].mxu0 %v150
    %v276 = vpop.f32.mrb[0].mxu0
    %v277 = vadd.f32 0.0, %v276
    %v278 = vpop.f32.mrb[0].mxu0
    %v279 = vpop.f32.mrb[0].mxu0
    %v280 = vadd.f32 0.0, %v279
    %v281 = vpop.f32.mrb[0].mxu0
    %282 = vmatprep.mubr.bf16.mxu0 0
    %283 = vmatmul.mubr.bf16.gmra.mrb[0].mxu0 %v151
    %v284 = vpop.f32.mrb[0].mxu0
    %v285 = vadd.f32 0.0, %v284
    %v286 = vpop.f32.mrb[0].mxu0
    %v287 = vpop.f32.mrb[0].mxu0
    %v288 = vadd.f32 0.0, %v287
    %v289 = vpop.f32.mrb[0].mxu0
    %290 = vmatprep.mubr.bf16.mxu0 0
    %291 = vmatmul.mubr.bf16.gmra.mrb[0].mxu0 %v152
    %v292 = vpop.f32.mrb[0].mxu0
    %v293 = vadd.f32 0.0, %v292
    %v294 = vpop.f32.mrb[0].mxu0
    %v295 = vpop.f32.mrb[0].mxu0
    %v296 = vadd.f32 0.0, %v295
    %v297 = vpop.f32.mrb[0].mxu0
    %298 = vmatprep.mubr.bf16.mxu0 0
    %299 = vmatmul.mubr.bf16.gmra.mrb[0].mxu0 %v153
    %v300 = vpop.f32.mrb[0].mxu0
    %v301 = vadd.f32 0.0, %v300
    %v302 = vpop.f32.mrb[0].mxu0
    %v303 = vpop.f32.mrb[0].mxu0
    %v304 = vadd.f32 0.0, %v303
    %v305 = vpop.f32.mrb[0].mxu0
    %306 = vdwg.mxu0
    %v307 = vadd.f32 %v98, %v245
    %v308 = vadd.f32 %v99, %v248
    %v309 = vadd.f32 %v100, %v253
    %v310 = vadd.f32 %v101, %v256
    %v311 = vadd.f32 %v102, %v261
    %v312 = vadd.f32 %v103, %v264
    %v313 = vadd.f32 %v104, %v269
    %v314 = vadd.f32 %v105, %v272
    %v315 = vadd.f32 %v106, %v277
    %v316 = vadd.f32 %v107, %v280
    %v317 = vadd.f32 %v108, %v285
    %v318 = vadd.f32 %v109, %v288
    %v319 = vadd.f32 %v110, %v293
    %v320 = vadd.f32 %v111, %v296
    %v321 = vadd.f32 %v112, %v301
    %v322 = vadd.f32 %v113, %v304
    %323 = vst [vmem:[#allocation2] sm:$0xff] %v307
    %324 = vst [vmem:[#allocation2 + $0x8] sm:$0xff] %v308
    %325 = vst [vmem:[#allocation2 + $0x10] sm:$0xff] %v309
    %326 = vst [vmem:[#allocation2 + $0x18] sm:$0xff] %v310
    %327 = vst [vmem:[#allocation2 + $0x20] sm:$0xff] %v311
    %328 = vst [vmem:[#allocation2 + $0x28] sm:$0xff] %v312
    %329 = vst [vmem:[#allocation2 + $0x30] sm:$0xff] %v313
    %330 = vst [vmem:[#allocation2 + $0x38] sm:$0xff] %v314
    %331 = vst [vmem:[#allocation2 + $0x40] sm:$0xff] %v315
    %332 = vst [vmem:[#allocation2 + $0x48] sm:$0xff] %v316
    %333 = vst [vmem:[#allocation2 + $0x50] sm:$0xff] %v317
    %334 = vst [vmem:[#allocation2 + $0x58] sm:$0xff] %v318
    %335 = vst [vmem:[#allocation2 + $0x60] sm:$0xff] %v319
    %336 = vst [vmem:[#allocation2 + $0x68] sm:$0xff] %v320
    %337 = vst [vmem:[#allocation2 + $0x70] sm:$0xff] %v321
    %338 = vst [vmem:[#allocation2 + $0x78] sm:$0xff] %v322
    // Predicated region
    $region22: #{tpu_custom_call.1} parent=1 // pred_check
      %p339 = pneg %p41
    $region23: #{tpu_custom_call.1} parent=1 // pred_check_branch
      %341 = sbr.rel (%p339) target = $region25
    $region24: #{tpu_custom_call.1} parent=1 // pred_region
      %v342 = vld [vmem:[#allocation2] sm:$0xff]
      %v343 = vld [vmem:[#allocation2 + $0x8] sm:$0xff]
      %v344 = vld [vmem:[#allocation2 + $0x10] sm:$0xff]
      %v345 = vld [vmem:[#allocation2 + $0x18] sm:$0xff]
      %v346 = vld [vmem:[#allocation2 + $0x20] sm:$0xff]
      %v347 = vld [vmem:[#allocation2 + $0x28] sm:$0xff]
      %v348 = vld [vmem:[#allocation2 + $0x30] sm:$0xff]
      %v349 = vld [vmem:[#allocation2 + $0x38] sm:$0xff]
      %v350 = vld [vmem:[#allocation2 + $0x40] sm:$0xff]
      %v351 = vld [vmem:[#allocation2 + $0x48] sm:$0xff]
      %v352 = vld [vmem:[#allocation2 + $0x50] sm:$0xff]
      %v353 = vld [vmem:[#allocation2 + $0x58] sm:$0xff]
      %v354 = vld [vmem:[#allocation2 + $0x60] sm:$0xff]
      %v355 = vld [vmem:[#allocation2 + $0x68] sm:$0xff]
      %v356 = vld [vmem:[#allocation2 + $0x70] sm:$0xff]
      %v357 = vld [vmem:[#allocation2 + $0x78] sm:$0xff]
      %v358 = vpack.c.bf16 %v343, %v342
      %v359 = vpack.c.bf16 %v345, %v344
      %v360 = vpack.c.bf16 %v347, %v346
      %v361 = vpack.c.bf16 %v349, %v348
      %v362 = vpack.c.bf16 %v351, %v350
      %v363 = vpack.c.bf16 %v353, %v352
      %v364 = vpack.c.bf16 %v355, %v354
      %v365 = vpack.c.bf16 %v357, %v356
      %v374 = vunpack.c.l.b16 %v358
      %v375 = vunpack.c.h.b16 %v358
      %v376 = vunpack.c.l.b16 %v359
      %v377 = vunpack.c.h.b16 %v359
      %v378 = vunpack.c.l.b16 %v360
      %v379 = vunpack.c.h.b16 %v360
      %v380 = vunpack.c.l.b16 %v361
      %v381 = vunpack.c.h.b16 %v361
      %v382 = vunpack.c.l.b16 %v362
      %v383 = vunpack.c.h.b16 %v362
      %v384 = vunpack.c.l.b16 %v363
      %v385 = vunpack.c.h.b16 %v363
      %v386 = vunpack.c.l.b16 %v364
      %v387 = vunpack.c.h.b16 %v364
      %v388 = vunpack.c.l.b16 %v365
      %v389 = vunpack.c.h.b16 %v365
      %v390 = vpack.c.b16 %v374, %v374
      %v391 = vpack.c.b16 %v375, %v375
      %v392 = vpack.c.b16 %v376, %v376
      %v393 = vpack.c.b16 %v377, %v377
      %v394 = vpack.c.b16 %v378, %v378
      %v395 = vpack.c.b16 %v379, %v379
      %v396 = vpack.c.b16 %v380, %v380
      %v397 = vpack.c.b16 %v381, %v381
      %v398 = vpack.c.b16 %v382, %v382
      %v399 = vpack.c.b16 %v383, %v383
      %v400 = vpack.c.b16 %v384, %v384
      %v401 = vpack.c.b16 %v385, %v385
      %v402 = vpack.c.b16 %v386, %v386
      %v403 = vpack.c.b16 %v387, %v387
      %v404 = vpack.c.b16 %v388, %v388
      %v405 = vpack.c.b16 %v389, %v389
      %422 = vst [vmem:[#allocation8] sm:$0xf] %v390
      %423 = vst [vmem:[#allocation8 + $0x4] sm:$0xf] %v391
      %424 = vst [vmem:[#allocation8 + $0x8] sm:$0xf] %v392
      %425 = vst [vmem:[#allocation8 + $0xc] sm:$0xf] %v393
      %426 = vst [vmem:[#allocation8 + $0x10] sm:$0xf] %v394
      %427 = vst [vmem:[#allocation8 + $0x14] sm:$0xf] %v395
      %428 = vst [vmem:[#allocation8 + $0x18] sm:$0xf] %v396
      %429 = vst [vmem:[#allocation8 + $0x1c] sm:$0xf] %v397
      %430 = vst [vmem:[#allocation8 + $0x20] sm:$0xf] %v398
      %431 = vst [vmem:[#allocation8 + $0x24] sm:$0xf] %v399
      %432 = vst [vmem:[#allocation8 + $0x28] sm:$0xf] %v400
      %433 = vst [vmem:[#allocation8 + $0x2c] sm:$0xf] %v401
      %434 = vst [vmem:[#allocation8 + $0x30] sm:$0xf] %v402
      %435 = vst [vmem:[#allocation8 + $0x34] sm:$0xf] %v403
      %436 = vst [vmem:[#allocation8 + $0x38] sm:$0xf] %v404
      %437 = vst [vmem:[#allocation8 + $0x3c] sm:$0xf] %v405
    $region25: #{tpu_custom_call.1} parent=1 // pred_fallthru
      _
    // Predicated region
    $region26: #{tpu_custom_call.1} parent=1 // pred_check
      _
    $region27: #{tpu_custom_call.1} parent=1 // pred_check_branch
      %439 = sbr.rel (0) target = $region29
    $region28: #{tpu_custom_call.1} parent=1 // pred_region
      %s441 = ssub.s32 1024, 1024
      %442 = vsyncadd [#allocation5], %s441
      %s443 = sshll.u32 [#allocation8], 4
      %s444 = int_to_ptr.vmem [resolvable:$true] %s443
      %449 = dma.vmem_to_hbm [thread:$0]  %s444, 1024, %s2, [#allocation5], 64, 64, 4
    $region29: #{tpu_custom_call.1} parent=1 // pred_fallthru
      _
    // Predicated region
    $region30: #{tpu_custom_call.1} parent=1 // pred_check
      _
    $region31: #{tpu_custom_call.1} parent=1 // pred_check_branch
      %451 = sbr.rel (0) target = $region33
    $region32: #{tpu_custom_call.1} parent=1 // pred_region
      %452 = dma.done [#allocation5], 1024
    $region33: #{tpu_custom_call.1} parent=1 // pred_fallthru
      _
    %453 = vsyncpa [#allocation4], 1
    %454 = vsyncpa [#allocation7], 1
    %455 = vsyncpa [#allocation5], 1

</llo_original>
